<compile_context>
chip_gen: v5e
topology: v5e:2x2
jax: 0.10.0
libtpu: 0.0.40
codegen_flags: <defaults>
</compile_context>

<pallas_src>
import functools
import math

import jax
import jax.numpy as jnp
from jax.experimental import pallas as pl
from jax.experimental.pallas import tpu as pltpu


# ----------------------------------------------------------------------------
# Fused kernel: one TB-row batch block per grid step, everything else in VMEM.
# ----------------------------------------------------------------------------
def fused_cnn1d_kernel(x_ref, wb_ref, bc_ref, w1_ref, b1_ref, w2_ref, b2_ref,
                       o_ref, *, P):
    # x_ref : (TB, C)    spectral bands on lanes, batch rows on sublanes
    # wb_ref: (P, C, F)  banded conv weights (F = Cout*L_pool, channel-major)
    # bc_ref: (1, F)     conv bias broadcast over pooled positions
    # w1_ref: (F, Hp), b1_ref: (1, Hp)   fc1 (hidden padded to 128 lanes)
    # w2_ref: (Hp, Np), b2_ref: (1, Np)  fc2 (classes padded to 128 lanes)
    # o_ref : (TB, Np)
    x = x_ref[...]

    # Conv1d + MaxPool1d: P MXU matmuls + elementwise max (VPU), no relayout.
    acc = jnp.dot(x, wb_ref[0], preferred_element_type=jnp.float32)      # (TB, F)
    for j in range(1, P):
        acc = jnp.maximum(
            acc, jnp.dot(x, wb_ref[j], preferred_element_type=jnp.float32))
    feats = jnp.tanh(acc + bc_ref[...])                                   # (TB, F)

    # fc1 + tanh + fc2, all lane-dense.
    h = jnp.tanh(jnp.dot(feats, w1_ref[...],
                         preferred_element_type=jnp.float32) + b1_ref[...])
    o_ref[...] = jnp.dot(h, w2_ref[...],
                         preferred_element_type=jnp.float32) + b2_ref[...]


# ----------------------------------------------------------------------------
# Trace-time weight preprocessing (free: runs once on tiny weights)
# ----------------------------------------------------------------------------
def _banded_conv_weights(conv_w, P, L_out, L_pool):
    """PyTorch conv weight (Cout,1,K) -> (P, C, F) banded matrices such that
       (x @ W_j)[b, o*L_pool + p] == conv1d(x)[b, o, p*P + j]  (bias excluded).
       max over j then reproduces MaxPool1d(P), already in PyTorch's
       channel-major flatten order (no activation transpose needed)."""
    cout, _, K = conv_w.shape
    C = L_out + K - 1
    F = cout * L_pool
    w = conv_w[:, 0, :].astype(jnp.float32)                   # (Cout, K)
    c = jnp.arange(C)[None, :, None]                          # (1, C, 1)
    j = jnp.arange(P)[:, None, None]                          # (P, 1, 1)
    f = jnp.arange(F)
    o = (f // L_pool)[None, None, :]                          # (1, 1, F)
    p = (f % L_pool)[None, None, :]                           # (1, 1, F)
    k = c - (p * P + j)                                       # (P, C, F)
    valid = (k >= 0) & (k < K)
    vals = w[o, jnp.clip(k, 0, K - 1)]                        # (P, C, F)
    return jnp.where(valid, vals, 0.0)


# ----------------------------------------------------------------------------
# Parameter init (matches CNN1D.__init__ + weight_init: U(-0.05,0.05), zero bias)
# ----------------------------------------------------------------------------
def init_params(key, n_channels, n_classes, kernel_size, pool_size):
    K, P = kernel_size, pool_size
    L_out = n_channels - K + 1
    L_pool = (L_out - P) // P + 1
    cout = 20
    features_size = cout * L_pool
    k1, k2, k3 = jax.random.split(key, 3)
    return dict(
        conv_w=jax.random.uniform(k1, (cout, 1, K), jnp.float32, -0.05, 0.05),
        conv_b=jnp.zeros((cout,), jnp.float32),
        fc1_w=jax.random.uniform(k2, (100, features_size), jnp.float32, -0.05, 0.05),
        fc1_b=jnp.zeros((100,), jnp.float32),
        fc2_w=jax.random.uniform(k3, (n_classes, 100), jnp.float32, -0.05, 0.05),
        fc2_b=jnp.zeros((n_classes,), jnp.float32),
    )


# ----------------------------------------------------------------------------
# Forward pass
# ----------------------------------------------------------------------------
def cnn1d_forward(x, params, *, kernel_size, pool_size):
    B, C = x.shape[0], x.shape[1]
    K, P = kernel_size, pool_size
    L_out = C - K + 1
    L_pool = (L_out - P) // P + 1
    cout = params["conv_w"].shape[0]
    hidden = params["fc1_w"].shape[0]
    n_classes = params["fc2_w"].shape[0]
    F = cout * L_pool
    HP = ((hidden + 127) // 128) * 128       # lane-pad hidden  (100 -> 128)
    NP = ((n_classes + 127) // 128) * 128    # lane-pad classes (5   -> 128)

    # x.float(); squeeze(-1).squeeze(-1)  ->  (B, C)
    x2 = x.astype(jnp.float32).reshape(B, C)

    # Preprocess weights once at trace time (all zero-padding / banding free).
    wb = _banded_conv_weights(params["conv_w"], P, L_out, L_pool)        # (P, C, F)
    bc = jnp.repeat(params["conv_b"].astype(jnp.float32), L_pool)[None, :]  # (1, F)
    w1 = jnp.zeros((F, HP), jnp.float32).at[:, :hidden].set(params["fc1_w"].T)
    b1 = jnp.zeros((1, HP), jnp.float32).at[:, :hidden].set(params["fc1_b"])
    w2 = jnp.zeros((HP, NP), jnp.float32).at[:hidden, :n_classes].set(params["fc2_w"].T)
    b2 = jnp.zeros((1, NP), jnp.float32).at[:, :n_classes].set(params["fc2_b"])

    # Batch block size: fill sublanes / MXU M-dim, keep >=2 grid steps for
    # large B so v7x's two TensorCores can split the batch.
    if B >= 256:
        TB = 256
    elif B >= 128:
        TB = 128
    else:
        TB = B
    grid = (pl.cdiv(B, TB),)

    out_padded = pl.pallas_call(
        functools.partial(fused_cnn1d_kernel, P=P),
        out_shape=jax.ShapeDtypeStruct((B, NP), jnp.float32),
        grid=grid,
        in_specs=[
            pl.BlockSpec((TB, C), lambda b: (b, 0)),
            pl.BlockSpec((P, C, F), lambda b: (0, 0, 0)),
            pl.BlockSpec((1, F), lambda b: (0, 0)),
            pl.BlockSpec((F, HP), lambda b: (0, 0)),
            pl.BlockSpec((1, HP), lambda b: (0, 0)),
            pl.BlockSpec((HP, NP), lambda b: (0, 0)),
            pl.BlockSpec((1, NP), lambda b: (0, 0)),
        ],
        out_specs=pl.BlockSpec((TB, NP), lambda b: (b, 0)),
        compiler_params=pltpu.CompilerParams(
            dimension_semantics=("parallel",)),
    )(x2, wb, bc, w1, b1, w2, b2)

    return out_padded[:, :n_classes]


# ----------------------------------------------------------------------------
# Pure-JAX reference (mirrors the PyTorch forward) for a correctness check
# ----------------------------------------------------------------------------
def cnn1d_reference(x, params, *, kernel_size, pool_size):
    B, C = x.shape[0], x.shape[1]
    K, P = kernel_size, pool_size
    L_out = C - K + 1
    L_pool = (L_out - P) // P + 1
    cout = params["conv_w"].shape[0]
    hi = jax.lax.Precision.HIGHEST

    xf = x.astype(jnp.float32).reshape(B, C)
    w = params["conv_w"][:, 0, :]                                        # (Cout, K)
    cols = jnp.stack([xf[:, k:k + L_out] for k in range(K)], axis=1)     # (B, K, L_out)
    conv = jnp.einsum("bkl,ok->bol", cols, w, precision=hi) \
        + params["conv_b"][None, :, None]                                # (B, Cout, L_out)
    pooled = conv[:, :, :L_pool * P].reshape(B, cout, L_pool, P).max(axis=-1)
    h = jnp.tanh(pooled).reshape(B, cout * L_pool)
    h = jnp.tanh(jnp.dot(h, params["fc1_w"].T, precision=hi) + params["fc1_b"])
    return jnp.dot(h, params["fc2_w"].T, precision=hi) + params["fc2_b"]


if __name__ == "__main__":
    n_channels = 64
    n_classes = 5
    batch = 4
    kernel_size = math.ceil(n_channels / 10)   # 7  (PyTorch default)
    pool_size = math.ceil(kernel_size / 5)     # 2  (PyTorch default)

    key = jax.random.PRNGKey(0)
    pkey, xkey = jax.random.split(key)
    params = init_params(pkey, n_channels, n_classes, kernel_size, pool_size)
    x = jax.random.normal(xkey, (batch, n_channels, 1, 1), jnp.float32)

    out = cnn1d_forward(x, params, kernel_size=kernel_size, pool_size=pool_size)
    out = jax.block_until_ready(out)

    ref = cnn1d_reference(x, params, kernel_size=kernel_size, pool_size=pool_size)
    assert out.shape == (batch, n_classes)
    assert jnp.allclose(out, ref, atol=1e-2, rtol=1e-2), \
        float(jnp.max(jnp.abs(out - ref)))
    print("KERNEL_OK")
</pallas_src>

<mosaic_0001>
module attributes {stable_mosaic.version = 11 : i64} {
  func.func @fused_cnn1d_kernel(%arg0: i32, %arg1: memref<4x64xf32, #tpu.memory_space<vmem>>, %arg2: memref<2x64x580xf32, #tpu.memory_space<vmem>>, %arg3: memref<1x580xf32, #tpu.memory_space<vmem>>, %arg4: memref<580x128xf32, #tpu.memory_space<vmem>>, %arg5: memref<1x128xf32, #tpu.memory_space<vmem>>, %arg6: memref<128x128xf32, #tpu.memory_space<vmem>>, %arg7: memref<1x128xf32, #tpu.memory_space<vmem>>, %arg8: memref<4x128xf32, #tpu.memory_space<vmem>>) attributes {dimension_semantics = [#tpu.dimension_semantics<parallel>], iteration_bounds = array<i64: 1>, scalar_prefetch = 0 : i64, scratch_operands = 0 : i64, tpu.core_type = #tpu.core_type<tc>, window_params = [{transform_indices = @transform_0, window_bounds = array<i64: 4, 64>}, {pipeline_mode = #tpu.pipeline_mode<synchronous>, transform_indices = @transform_1, window_bounds = array<i64: 2, 64, 580>}, {pipeline_mode = #tpu.pipeline_mode<synchronous>, transform_indices = @transform_2, window_bounds = array<i64: 1, 580>}, {pipeline_mode = #tpu.pipeline_mode<synchronous>, transform_indices = @transform_3, window_bounds = array<i64: 580, 128>}, {pipeline_mode = #tpu.pipeline_mode<synchronous>, transform_indices = @transform_4, window_bounds = array<i64: 1, 128>}, {pipeline_mode = #tpu.pipeline_mode<synchronous>, transform_indices = @transform_5, window_bounds = array<i64: 128, 128>}, {pipeline_mode = #tpu.pipeline_mode<synchronous>, transform_indices = @transform_6, window_bounds = array<i64: 1, 128>}, {transform_indices = @transform_7, window_bounds = array<i64: 4, 128>}]} {
    %c0 = arith.constant 0 : index
    %c0_0 = arith.constant 0 : index
    %0 = vector.load %arg1[%c0, %c0_0] : memref<4x64xf32, #tpu.memory_space<vmem>>, vector<4x64xf32>
    %c0_1 = arith.constant 0 : index
    %c0_2 = arith.constant 0 : index
    %c0_3 = arith.constant 0 : index
    %1 = vector.load %arg2[%c0_1, %c0_2, %c0_3] : memref<2x64x580xf32, #tpu.memory_space<vmem>>, vector<1x64x580xf32>
    %2 = vector.shape_cast %1 : vector<1x64x580xf32> to vector<64x580xf32>
    %cst = arith.constant dense<0.000000e+00> : vector<4x580xf32>
    %3 = tpu.matmul %0, %2, %cst {dimension_numbers = #tpu.dot_dimension_numbers<[1], [0], [0], [1], [0, 0, 1, 1], [], []>} : vector<4x64xf32>, vector<64x580xf32>, vector<4x580xf32> -> vector<4x580xf32>
    %c1 = arith.constant 1 : index
    %c0_4 = arith.constant 0 : index
    %c0_5 = arith.constant 0 : index
    %4 = vector.load %arg2[%c1, %c0_4, %c0_5] : memref<2x64x580xf32, #tpu.memory_space<vmem>>, vector<1x64x580xf32>
    %5 = vector.shape_cast %4 : vector<1x64x580xf32> to vector<64x580xf32>
    %cst_6 = arith.constant dense<0.000000e+00> : vector<4x580xf32>
    %6 = tpu.matmul %0, %5, %cst_6 {dimension_numbers = #tpu.dot_dimension_numbers<[1], [0], [0], [1], [0, 0, 1, 1], [], []>} : vector<4x64xf32>, vector<64x580xf32>, vector<4x580xf32> -> vector<4x580xf32>
    %7 = arith.maximumf %3, %6 : vector<4x580xf32>
    %c0_7 = arith.constant 0 : index
    %c0_8 = arith.constant 0 : index
    %8 = vector.load %arg3[%c0_7, %c0_8] : memref<1x580xf32, #tpu.memory_space<vmem>>, vector<1x580xf32>
    %9 = vector.broadcast %8 : vector<1x580xf32> to vector<4x580xf32>
    %10 = arith.addf %7, %9 : vector<4x580xf32>
    %11 = math.tanh %10 : vector<4x580xf32>
    %c0_9 = arith.constant 0 : index
    %c0_10 = arith.constant 0 : index
    %12 = vector.load %arg4[%c0_9, %c0_10] : memref<580x128xf32, #tpu.memory_space<vmem>>, vector<580x128xf32>
    %cst_11 = arith.constant dense<0.000000e+00> : vector<4x128xf32>
    %13 = tpu.matmul %11, %12, %cst_11 {dimension_numbers = #tpu.dot_dimension_numbers<[1], [0], [0], [1], [0, 0, 1, 1], [], []>} : vector<4x580xf32>, vector<580x128xf32>, vector<4x128xf32> -> vector<4x128xf32>
    %c0_12 = arith.constant 0 : index
    %c0_13 = arith.constant 0 : index
    %14 = vector.load %arg5[%c0_12, %c0_13] : memref<1x128xf32, #tpu.memory_space<vmem>>, vector<1x128xf32>
    %15 = vector.broadcast %14 : vector<1x128xf32> to vector<4x128xf32>
    %16 = arith.addf %13, %15 : vector<4x128xf32>
    %17 = math.tanh %16 : vector<4x128xf32>
    %c0_14 = arith.constant 0 : index
    %c0_15 = arith.constant 0 : index
    %18 = vector.load %arg6[%c0_14, %c0_15] : memref<128x128xf32, #tpu.memory_space<vmem>>, vector<128x128xf32>
    %cst_16 = arith.constant dense<0.000000e+00> : vector<4x128xf32>
    %19 = tpu.matmul %17, %18, %cst_16 {dimension_numbers = #tpu.dot_dimension_numbers<[1], [0], [0], [1], [0, 0, 1, 1], [], []>} : vector<4x128xf32>, vector<128x128xf32>, vector<4x128xf32> -> vector<4x128xf32>
    %c0_17 = arith.constant 0 : index
    %c0_18 = arith.constant 0 : index
    %20 = vector.load %arg7[%c0_17, %c0_18] : memref<1x128xf32, #tpu.memory_space<vmem>>, vector<1x128xf32>
    %21 = vector.broadcast %20 : vector<1x128xf32> to vector<4x128xf32>
    %22 = arith.addf %19, %21 : vector<4x128xf32>
    %c0_19 = arith.constant 0 : index
    %c0_20 = arith.constant 0 : index
    %23 = vector.load %arg8[%c0_19, %c0_20] : memref<4x128xf32, #tpu.memory_space<vmem>>, vector<4x128xf32>
    tpu.vector_store %arg8[%c0_19, %c0_20], %22 {strides = array<i32>} : memref<4x128xf32, #tpu.memory_space<vmem>>, vector<4x128xf32>,
    return
  }
  func.func @transform_0(%arg0: i32) -> (i32, i32) {
    %c0_i32 = arith.constant 0 : i32
    %c0_i32_0 = arith.constant 0 : i32
    return %arg0, %c0_i32 : i32, i32
  }
  func.func @transform_1(%arg0: i32) -> (i32, i32, i32) {
    %c0_i32 = arith.constant 0 : i32
    %c0_i32_0 = arith.constant 0 : i32
    %c0_i32_1 = arith.constant 0 : i32
    %c0_i32_2 = arith.constant 0 : i32
    return %c0_i32, %c0_i32_0, %c0_i32_1 : i32, i32, i32
  }
  func.func @transform_2(%arg0: i32) -> (i32, i32) {
    %c0_i32 = arith.constant 0 : i32
    %c0_i32_0 = arith.constant 0 : i32
    %c0_i32_1 = arith.constant 0 : i32
    return %c0_i32, %c0_i32_0 : i32, i32
  }
  func.func @transform_3(%arg0: i32) -> (i32, i32) {
    %c0_i32 = arith.constant 0 : i32
    %c0_i32_0 = arith.constant 0 : i32
    %c0_i32_1 = arith.constant 0 : i32
    return %c0_i32, %c0_i32_0 : i32, i32
  }
  func.func @transform_4(%arg0: i32) -> (i32, i32) {
    %c0_i32 = arith.constant 0 : i32
    %c0_i32_0 = arith.constant 0 : i32
    %c0_i32_1 = arith.constant 0 : i32
    return %c0_i32, %c0_i32_0 : i32, i32
  }
  func.func @transform_5(%arg0: i32) -> (i32, i32) {
    %c0_i32 = arith.constant 0 : i32
    %c0_i32_0 = arith.constant 0 : i32
    %c0_i32_1 = arith.constant 0 : i32
    return %c0_i32, %c0_i32_0 : i32, i32
  }
  func.func @transform_6(%arg0: i32) -> (i32, i32) {
    %c0_i32 = arith.constant 0 : i32
    %c0_i32_0 = arith.constant 0 : i32
    %c0_i32_1 = arith.constant 0 : i32
    return %c0_i32, %c0_i32_0 : i32, i32
  }
  func.func @transform_7(%arg0: i32) -> (i32, i32) {
    %c0_i32 = arith.constant 0 : i32
    %c0_i32_0 = arith.constant 0 : i32
    return %arg0, %c0_i32 : i32, i32
  }
}

</mosaic_0001>

<llo_original>
// kernel: tpu_custom_call.1
$region0: #{tpu_custom_call.1}
  #allocation0 [shape = 'u32[]', space=smem, size = 0x4, offset = 0x4, fixed_abs, tag = 'smem constant byte address 0x4 - core index']
  #allocation1 [shape = 'u32[72,128]{1,0:T(1,128)}', space=vmem, size = 0x9000, scoped, tag = 'internal scratch']
  %s0 = inlined_call_operand.hbm [shape: f32[4,64], index: 0, kind: input, shape index: {}]
  %s1 = inlined_call_operand.hbm [shape: f32[2,64,580], index: 1, kind: input, shape index: {}]
  %s2 = inlined_call_operand.hbm [shape: f32[1,580], index: 2, kind: input, shape index: {}]
  %s3 = inlined_call_operand.hbm [shape: f32[580,128], index: 3, kind: input, shape index: {}]
  %s4 = inlined_call_operand.vmem [shape: f32[1,128], index: 4, kind: input, shape index: {}]
  %s5 = inlined_call_operand.hbm [shape: f32[128,128], index: 5, kind: input, shape index: {}]
  %s6 = inlined_call_operand.vmem [shape: f32[1,128], index: 6, kind: input, shape index: {}]
  %s7 = inlined_call_operand.hbm [shape: f32[4,128], index: 7, kind: output, shape index: {}]
  %s8 = sld [smem:[#allocation0]]
  $region58: #{tpu_custom_call.1} parent=0
    _
  %s10 = ssub.s32 1, %s8
  %s11 = scalar_select 0, %s10, %s8
  $region1: #{tpu_custom_call.1} parent=0
    #allocation2 [shape = 'u8[2048]{0}', space=vmem, size = 0x800, scoped, tag = 'input window, operand 0, single buffered']
    #allocation3 [shape = 's32[1]{0}', space=sflag, size = 0x4, scoped, tag = 'scoped memory for tpu_custom_call.1']
    #allocation4 [shape = 's32[1]{0}', space=sflag, size = 0x4, scoped, tag = 'scoped memory for tpu_custom_call.1']
    #allocation5 [shape = 'u8[327680]{0}', space=vmem, size = 0x50000, scoped, tag = 'input window, operand 1, single buffered']
    #allocation6 [shape = 's32[1]{0}', space=sflag, size = 0x4, scoped, tag = 'scoped memory for tpu_custom_call.1']
    #allocation7 [shape = 'u8[2560]{0}', space=vmem, size = 0xc00, scoped, tag = 'input window, operand 2, single buffered']
    #allocation8 [shape = 'u8[299008]{0}', space=vmem, size = 0x49000, scoped, tag = 'input window, operand 3, single buffered']
    #allocation9 [shape = 's32[1]{0}', space=sflag, size = 0x4, scoped, tag = 'scoped memory for tpu_custom_call.1']
    #allocation10 [shape = 'u8[65536]{0}', space=vmem, size = 0x10000, scoped, tag = 'input window, operand 5, single buffered']
    #allocation11 [shape = 'u8[2048]{0}', space=vmem, size = 0x800, scoped, tag = 'output window, operand 0, single buffered']
    %12 = vsyncpa [#allocation3], 0
    %13 = vsyncpa [#allocation6], 0
    %14 = vsyncpa [#allocation9], 0
    %15 = vsyncpa [#allocation4], 0
    // Predicated region
    $region2: #{tpu_custom_call.1} parent=1 // pred_check
      _
    $region3: #{tpu_custom_call.1} parent=1 // pred_check_branch
      %17 = sbr.rel (0) target = $region5
    $region4: #{tpu_custom_call.1} parent=1 // pred_region
      %19 = vsyncadd [#allocation3], 0
      %s21 = sshll.u32 %s0, 4
      %s22 = int_to_ptr.hbm [resolvable:$true] %s21
      %s23 = sshll.u32 [#allocation2], 4
      %s24 = int_to_ptr.vmem [resolvable:$true] %s23
      %26 = dma.hbm_to_vmem [thread:$0]  %s22, 64, %s24, [#allocation3]
    $region5: #{tpu_custom_call.1} parent=1 // pred_fallthru
      _
    // Predicated region
    $region6: #{tpu_custom_call.1} parent=1 // pred_check
      _
    $region7: #{tpu_custom_call.1} parent=1 // pred_check_branch
      %28 = sbr.rel (0) target = $region9
    $region8: #{tpu_custom_call.1} parent=1 // pred_region
      %30 = vsyncadd [#allocation6], 0
      %s31 = sshll.u32 %s1, 4
      %s32 = int_to_ptr.hbm [resolvable:$true] %s31
      %s33 = sshll.u32 [#allocation5], 4
      %s34 = int_to_ptr.vmem [resolvable:$true] %s33
      %39 = dma.hbm_to_vmem [thread:$0]  %s32, 10240, %s34, [#allocation6], 640, 640, 40
    $region9: #{tpu_custom_call.1} parent=1 // pred_fallthru
      _
    // Predicated region
    $region10: #{tpu_custom_call.1} parent=1 // pred_check
      _
    $region11: #{tpu_custom_call.1} parent=1 // pred_check_branch
      %41 = sbr.rel (0) target = $region13
    $region12: #{tpu_custom_call.1} parent=1 // pred_region
      %43 = vsyncadd [#allocation6], 0
      %s45 = sshll.u32 %s2, 4
      %s46 = int_to_ptr.hbm [resolvable:$true] %s45
      %s47 = sshll.u32 [#allocation7], 4
      %s48 = int_to_ptr.vmem [resolvable:$true] %s47
      %50 = dma.hbm_to_vmem [thread:$0]  %s46, 80, %s48, [#allocation6]
    $region13: #{tpu_custom_call.1} parent=1 // pred_fallthru
      _
    // Predicated region
    $region14: #{tpu_custom_call.1} parent=1 // pred_check
      _
    $region15: #{tpu_custom_call.1} parent=1 // pred_check_branch
      %52 = sbr.rel (0) target = $region17
    $region16: #{tpu_custom_call.1} parent=1 // pred_region
      %54 = vsyncadd [#allocation9], 0
      %s55 = sshll.u32 %s3, 4
      %s56 = int_to_ptr.hbm [resolvable:$true] %s55
      %s57 = sshll.u32 [#allocation8], 4
      %s58 = int_to_ptr.vmem [resolvable:$true] %s57
      %63 = dma.hbm_to_vmem [thread:$0]  %s56, 9344, %s58, [#allocation9], 128, 128, 8
    $region17: #{tpu_custom_call.1} parent=1 // pred_fallthru
      _
    // Predicated region
    $region18: #{tpu_custom_call.1} parent=1 // pred_check
      _
    $region19: #{tpu_custom_call.1} parent=1 // pred_check_branch
      %65 = sbr.rel (0) target = $region21
    $region20: #{tpu_custom_call.1} parent=1 // pred_region
      _
    $region21: #{tpu_custom_call.1} parent=1 // pred_fallthru
      _
    // Predicated region
    $region22: #{tpu_custom_call.1} parent=1 // pred_check
      _
    $region23: #{tpu_custom_call.1} parent=1 // pred_check_branch
      %67 = sbr.rel (0) target = $region25
    $region24: #{tpu_custom_call.1} parent=1 // pred_region
      %69 = vsyncadd [#allocation9], 0
      %s70 = sshll.u32 %s5, 4
      %s71 = int_to_ptr.hbm [resolvable:$true] %s70
      %s72 = sshll.u32 [#allocation10], 4
      %s73 = int_to_ptr.vmem [resolvable:$true] %s72
      %78 = dma.hbm_to_vmem [thread:$0]  %s71, 2048, %s73, [#allocation9], 128, 128, 8
    $region25: #{tpu_custom_call.1} parent=1 // pred_fallthru
      _
    // Predicated region
    $region26: #{tpu_custom_call.1} parent=1 // pred_check
      _
    $region27: #{tpu_custom_call.1} parent=1 // pred_check_branch
      %80 = sbr.rel (0) target = $region29
    $region28: #{tpu_custom_call.1} parent=1 // pred_region
      _
    $region29: #{tpu_custom_call.1} parent=1 // pred_fallthru
      _
    // Predicated region
    $region30: #{tpu_custom_call.1} parent=1 // pred_check
      _
    $region31: #{tpu_custom_call.1} parent=1 // pred_check_branch
      %82 = sbr.rel (0) target = $region33
    $region32: #{tpu_custom_call.1} parent=1 // pred_region
      %84 = dma.done [#allocation3], 64
    $region33: #{tpu_custom_call.1} parent=1 // pred_fallthru
      _
    // Predicated region
    $region34: #{tpu_custom_call.1} parent=1 // pred_check
      _
    $region35: #{tpu_custom_call.1} parent=1 // pred_check_branch
      %86 = sbr.rel (0) target = $region37
    $region36: #{tpu_custom_call.1} parent=1 // pred_region
      %88 = dma.done [#allocation6], 10240
    $region37: #{tpu_custom_call.1} parent=1 // pred_fallthru
      _
    // Predicated region
    $region38: #{tpu_custom_call.1} parent=1 // pred_check
      _
    $region39: #{tpu_custom_call.1} parent=1 // pred_check_branch
      %90 = sbr.rel (0) target = $region41
    $region40: #{tpu_custom_call.1} parent=1 // pred_region
      %92 = dma.done [#allocation6], 80
    $region41: #{tpu_custom_call.1} parent=1 // pred_fallthru
      _
    // Predicated region
    $region42: #{tpu_custom_call.1} parent=1 // pred_check
      _
    $region43: #{tpu_custom_call.1} parent=1 // pred_check_branch
      %94 = sbr.rel (0) target = $region45
    $region44: #{tpu_custom_call.1} parent=1 // pred_region
      %96 = dma.done [#allocation9], 9344
    $region45: #{tpu_custom_call.1} parent=1 // pred_fallthru
      _
    // Predicated region
    $region46: #{tpu_custom_call.1} parent=1 // pred_check
      _
    $region47: #{tpu_custom_call.1} parent=1 // pred_check_branch
      %98 = sbr.rel (0) target = $region49
    $region48: #{tpu_custom_call.1} parent=1 // pred_region
      %100 = dma.done [#allocation9], 2048
    $region49: #{tpu_custom_call.1} parent=1 // pred_fallthru
      _
    %v101 = vld [vmem:[#allocation2] sm:$0xf]
    %v102 = vld [vmem:[#allocation5] sm:$0xff]
    %v103 = vld [vmem:[#allocation5 + $0x8] sm:$0xff]
    %v104 = vld [vmem:[#allocation5 + $0x10] sm:$0xff]
    %v105 = vld [vmem:[#allocation5 + $0x18] sm:$0xff]
    %v106 = vld [vmem:[#allocation5 + $0x20] sm:$0xff]
    %v107 = vld [vmem:[#allocation5 + $0x28] sm:$0xff]
    %v108 = vld [vmem:[#allocation5 + $0x30] sm:$0xff]
    %v109 = vld [vmem:[#allocation5 + $0x38] sm:$0xff]
    %v110 = vld [vmem:[#allocation5 + $0x40] sm:$0xff]
    %v111 = vld [vmem:[#allocation5 + $0x48] sm:$0xff]
    %v112 = vld [vmem:[#allocation5 + $0x50] sm:$0xff]
    %v113 = vld [vmem:[#allocation5 + $0x58] sm:$0xff]
    %v114 = vld [vmem:[#allocation5 + $0x60] sm:$0xff]
    %v115 = vld [vmem:[#allocation5 + $0x68] sm:$0xff]
    %v116 = vld [vmem:[#allocation5 + $0x70] sm:$0xff]
    %v117 = vld [vmem:[#allocation5 + $0x78] sm:$0xff]
    %v118 = vld [vmem:[#allocation5 + $0x80] sm:$0xff]
    %v119 = vld [vmem:[#allocation5 + $0x88] sm:$0xff]
    %v120 = vld [vmem:[#allocation5 + $0x90] sm:$0xff]
    %v121 = vld [vmem:[#allocation5 + $0x98] sm:$0xff]
    %v122 = vld [vmem:[#allocation5 + $0xa0] sm:$0xff]
    %v123 = vld [vmem:[#allocation5 + $0xa8] sm:$0xff]
    %v124 = vld [vmem:[#allocation5 + $0xb0] sm:$0xff]
    %v125 = vld [vmem:[#allocation5 + $0xb8] sm:$0xff]
    %v126 = vld [vmem:[#allocation5 + $0xc0] sm:$0xff]
    %v127 = vld [vmem:[#allocation5 + $0xc8] sm:$0xff]
    %v128 = vld [vmem:[#allocation5 + $0xd0] sm:$0xff]
    %v129 = vld [vmem:[#allocation5 + $0xd8] sm:$0xff]
    %v130 = vld [vmem:[#allocation5 + $0xe0] sm:$0xff]
    %v131 = vld [vmem:[#allocation5 + $0xe8] sm:$0xff]
    %v132 = vld [vmem:[#allocation5 + $0xf0] sm:$0xff]
    %v133 = vld [vmem:[#allocation5 + $0xf8] sm:$0xff]
    %v134 = vld [vmem:[#allocation5 + $0x100] sm:$0xff]
    %v135 = vld [vmem:[#allocation5 + $0x108] sm:$0xff]
    %v136 = vld [vmem:[#allocation5 + $0x110] sm:$0xff]
    %v137 = vld [vmem:[#allocation5 + $0x118] sm:$0xff]
    %v138 = vld [vmem:[#allocation5 + $0x120] sm:$0xff]
    %v139 = vld [vmem:[#allocation5 + $0x128] sm:$0xff]
    %v140 = vld [vmem:[#allocation5 + $0x130] sm:$0xff]
    %v141 = vld [vmem:[#allocation5 + $0x138] sm:$0xff]
    %vm142 = vcmask 523264
    %v144 = vsel %vm142, %v101, 0
    %146 = vmatpush.msra.mxu0 0.0
    %147 = vmatpush.msra.mxu0 0.0
    %148 = vmatpush.msra.mxu0 0.0
    %149 = vmatpush.msra.mxu0 0.0
    %150 = vmatpush.msra.mxu0 0.0
    %151 = vmatpush.msra.mxu0 0.0
    %152 = vmatpush.msra.mxu0 0.0
    %153 = vmatpush.msra.mxu0 0.0
    %154 = vmatpush.msra.mxu0 %v137
    %155 = vmatpush.msra.mxu0 %v132
    %156 = vmatpush.msra.mxu0 %v127
    %157 = vmatpush.msra.mxu0 %v122
    %158 = vmatpush.msra.mxu0 %v117
    %159 = vmatpush.msra.mxu0 %v112
    %160 = vmatpush.msra.mxu0 %v107
    %161 = vmatpush.msra.mxu0 %v102
    %162 = vmatmul.f32.gmra.mxu0 %v144
    %v163 = vpop.f32.mrf.mxu0
    %v164 = vadd.f32 0.0, %v163
    %165 = vdwg.mxu0
    %166 = vmatpush.msra.mxu0 0.0
    %167 = vmatpush.msra.mxu0 0.0
    %168 = vmatpush.msra.mxu0 0.0
    %169 = vmatpush.msra.mxu0 0.0
    %170 = vmatpush.msra.mxu0 0.0
    %171 = vmatpush.msra.mxu0 0.0
    %172 = vmatpush.msra.mxu0 0.0
    %173 = vmatpush.msra.mxu0 0.0
    %174 = vmatpush.msra.mxu0 %v138
    %175 = vmatpush.msra.mxu0 %v133
    %176 = vmatpush.msra.mxu0 %v128
    %177 = vmatpush.msra.mxu0 %v123
    %178 = vmatpush.msra.mxu0 %v118
    %179 = vmatpush.msra.mxu0 %v113
    %180 = vmatpush.msra.mxu0 %v108
    %181 = vmatpush.msra.mxu0 %v103
    %182 = vmatmul.f32.gmra.mxu0 %v144
    %v183 = vpop.f32.mrf.mxu0
    %v184 = vadd.f32 0.0, %v183
    %185 = vdwg.mxu0
    %186 = vmatpush.msra.mxu0 0.0
    %187 = vmatpush.msra.mxu0 0.0
    %188 = vmatpush.msra.mxu0 0.0
    %189 = vmatpush.msra.mxu0 0.0
    %190 = vmatpush.msra.mxu0 0.0
    %191 = vmatpush.msra.mxu0 0.0
    %192 = vmatpush.msra.mxu0 0.0
    %193 = vmatpush.msra.mxu0 0.0
    %194 = vmatpush.msra.mxu0 %v139
    %195 = vmatpush.msra.mxu0 %v134
    %196 = vmatpush.msra.mxu0 %v129
    %197 = vmatpush.msra.mxu0 %v124
    %198 = vmatpush.msra.mxu0 %v119
    %199 = vmatpush.msra.mxu0 %v114
    %200 = vmatpush.msra.mxu0 %v109
    %201 = vmatpush.msra.mxu0 %v104
    %202 = vmatmul.f32.gmra.mxu0 %v144
    %v203 = vpop.f32.mrf.mxu0
    %v204 = vadd.f32 0.0, %v203
    %205 = vdwg.mxu0
    %206 = vmatpush.msra.mxu0 0.0
    %207 = vmatpush.msra.mxu0 0.0
    %208 = vmatpush.msra.mxu0 0.0
    %209 = vmatpush.msra.mxu0 0.0
    %210 = vmatpush.msra.mxu0 0.0
    %211 = vmatpush.msra.mxu0 0.0
    %212 = vmatpush.msra.mxu0 0.0
    %213 = vmatpush.msra.mxu0 0.0
    %214 = vmatpush.msra.mxu0 %v140
    %215 = vmatpush.msra.mxu0 %v135
    %216 = vmatpush.msra.mxu0 %v130
    %217 = vmatpush.msra.mxu0 %v125
    %218 = vmatpush.msra.mxu0 %v120
    %219 = vmatpush.msra.mxu0 %v115
    %220 = vmatpush.msra.mxu0 %v110
    %221 = vmatpush.msra.mxu0 %v105
    %222 = vmatmul.f32.gmra.mxu0 %v144
    %v223 = vpop.f32.mrf.mxu0
    %v224 = vadd.f32 0.0, %v223
    %225 = vdwg.mxu0
    %226 = vmatpush.msra.mxu0 0.0
    %227 = vmatpush.msra.mxu0 0.0
    %228 = vmatpush.msra.mxu0 0.0
    %229 = vmatpush.msra.mxu0 0.0
    %230 = vmatpush.msra.mxu0 0.0
    %231 = vmatpush.msra.mxu0 0.0
    %232 = vmatpush.msra.mxu0 0.0
    %233 = vmatpush.msra.mxu0 0.0
    %234 = vmatpush.msra.mxu0 %v141
    %235 = vmatpush.msra.mxu0 %v136
    %236 = vmatpush.msra.mxu0 %v131
    %237 = vmatpush.msra.mxu0 %v126
    %238 = vmatpush.msra.mxu0 %v121
    %239 = vmatpush.msra.mxu0 %v116
    %240 = vmatpush.msra.mxu0 %v111
    %241 = vmatpush.msra.mxu0 %v106
    %242 = vmatmul.f32.gmra.mxu0 %v144
    %v243 = vpop.f32.mrf.mxu0
    %v244 = vadd.f32 0.0, %v243
    %245 = vdwg.mxu0
    %s246 = scalar_lea.vmem [#allocation5], 320
    %v247 = vld [vmem:[%s246] sm:$0xff]
    %v248 = vld [vmem:[%s246 + $0x8] sm:$0xff]
    %v249 = vld [vmem:[%s246 + $0x10] sm:$0xff]
    %v250 = vld [vmem:[%s246 + $0x18] sm:$0xff]
    %v251 = vld [vmem:[%s246 + $0x20] sm:$0xff]
    %v252 = vld [vmem:[%s246 + $0x28] sm:$0xff]
    %v253 = vld [vmem:[%s246 + $0x30] sm:$0xff]
    %v254 = vld [vmem:[%s246 + $0x38] sm:$0xff]
    %v255 = vld [vmem:[%s246 + $0x40] sm:$0xff]
    %v256 = vld [vmem:[%s246 + $0x48] sm:$0xff]
    %v257 = vld [vmem:[%s246 + $0x50] sm:$0xff]
    %v258 = vld [vmem:[%s246 + $0x58] sm:$0xff]
    %v259 = vld [vmem:[%s246 + $0x60] sm:$0xff]
    %v260 = vld [vmem:[%s246 + $0x68] sm:$0xff]
    %v261 = vld [vmem:[%s246 + $0x70] sm:$0xff]
    %v262 = vld [vmem:[%s246 + $0x78] sm:$0xff]
    %v263 = vld [vmem:[%s246 + $0x80] sm:$0xff]
    %v264 = vld [vmem:[%s246 + $0x88] sm:$0xff]
    %v265 = vld [vmem:[%s246 + $0x90] sm:$0xff]
    %v266 = vld [vmem:[%s246 + $0x98] sm:$0xff]
    %v267 = vld [vmem:[%s246 + $0xa0] sm:$0xff]
    %v268 = vld [vmem:[%s246 + $0xa8] sm:$0xff]
    %v269 = vld [vmem:[%s246 + $0xb0] sm:$0xff]
    %v270 = vld [vmem:[%s246 + $0xb8] sm:$0xff]
    %v271 = vld [vmem:[%s246 + $0xc0] sm:$0xff]
    %v272 = vld [vmem:[%s246 + $0xc8] sm:$0xff]
    %v273 = vld [vmem:[%s246 + $0xd0] sm:$0xff]
    %v274 = vld [vmem:[%s246 + $0xd8] sm:$0xff]
    %v275 = vld [vmem:[%s246 + $0xe0] sm:$0xff]
    %v276 = vld [vmem:[%s246 + $0xe8] sm:$0xff]
    %v277 = vld [vmem:[%s246 + $0xf0] sm:$0xff]
    %v278 = vld [vmem:[%s246 + $0xf8] sm:$0xff]
    %v279 = vld [vmem:[%s246 + $0x100] sm:$0xff]
    %v280 = vld [vmem:[%s246 + $0x108] sm:$0xff]
    %v281 = vld [vmem:[%s246 + $0x110] sm:$0xff]
    %v282 = vld [vmem:[%s246 + $0x118] sm:$0xff]
    %v283 = vld [vmem:[%s246 + $0x120] sm:$0xff]
    %v284 = vld [vmem:[%s246 + $0x128] sm:$0xff]
    %v285 = vld [vmem:[%s246 + $0x130] sm:$0xff]
    %v286 = vld [vmem:[%s246 + $0x138] sm:$0xff]
    %287 = vmatpush.msra.mxu0 0.0
    %288 = vmatpush.msra.mxu0 0.0
    %289 = vmatpush.msra.mxu0 0.0
    %290 = vmatpush.msra.mxu0 0.0
    %291 = vmatpush.msra.mxu0 0.0
    %292 = vmatpush.msra.mxu0 0.0
    %293 = vmatpush.msra.mxu0 0.0
    %294 = vmatpush.msra.mxu0 0.0
    %295 = vmatpush.msra.mxu0 %v282
    %296 = vmatpush.msra.mxu0 %v277
    %297 = vmatpush.msra.mxu0 %v272
    %298 = vmatpush.msra.mxu0 %v267
    %299 = vmatpush.msra.mxu0 %v262
    %300 = vmatpush.msra.mxu0 %v257
    %301 = vmatpush.msra.mxu0 %v252
    %302 = vmatpush.msra.mxu0 %v247
    %303 = vmatmul.f32.gmra.mxu0 %v144
    %v304 = vpop.f32.mrf.mxu0
    %v305 = vadd.f32 0.0, %v304
    %306 = vdwg.mxu0
    %307 = vmatpush.msra.mxu0 0.0
    %308 = vmatpush.msra.mxu0 0.0
    %309 = vmatpush.msra.mxu0 0.0
    %310 = vmatpush.msra.mxu0 0.0
    %311 = vmatpush.msra.mxu0 0.0
    %312 = vmatpush.msra.mxu0 0.0
    %313 = vmatpush.msra.mxu0 0.0
    %314 = vmatpush.msra.mxu0 0.0
    %315 = vmatpush.msra.mxu0 %v283
    %316 = vmatpush.msra.mxu0 %v278
    %317 = vmatpush.msra.mxu0 %v273
    %318 = vmatpush.msra.mxu0 %v268
    %319 = vmatpush.msra.mxu0 %v263
    %320 = vmatpush.msra.mxu0 %v258
    %321 = vmatpush.msra.mxu0 %v253
    %322 = vmatpush.msra.mxu0 %v248
    %323 = vmatmul.f32.gmra.mxu0 %v144
    %v324 = vpop.f32.mrf.mxu0
    %v325 = vadd.f32 0.0, %v324
    %326 = vdwg.mxu0
    %327 = vmatpush.msra.mxu0 0.0
    %328 = vmatpush.msra.mxu0 0.0
    %329 = vmatpush.msra.mxu0 0.0
    %330 = vmatpush.msra.mxu0 0.0
    %331 = vmatpush.msra.mxu0 0.0
    %332 = vmatpush.msra.mxu0 0.0
    %333 = vmatpush.msra.mxu0 0.0
    %334 = vmatpush.msra.mxu0 0.0
    %335 = vmatpush.msra.mxu0 %v284
    %336 = vmatpush.msra.mxu0 %v279
    %337 = vmatpush.msra.mxu0 %v274
    %338 = vmatpush.msra.mxu0 %v269
    %339 = vmatpush.msra.mxu0 %v264
    %340 = vmatpush.msra.mxu0 %v259
    %341 = vmatpush.msra.mxu0 %v254
    %342 = vmatpush.msra.mxu0 %v249
    %343 = vmatmul.f32.gmra.mxu0 %v144
    %v344 = vpop.f32.mrf.mxu0
    %v345 = vadd.f32 0.0, %v344
    %346 = vdwg.mxu0
    %347 = vmatpush.msra.mxu0 0.0
    %348 = vmatpush.msra.mxu0 0.0
    %349 = vmatpush.msra.mxu0 0.0
    %350 = vmatpush.msra.mxu0 0.0
    %351 = vmatpush.msra.mxu0 0.0
    %352 = vmatpush.msra.mxu0 0.0
    %353 = vmatpush.msra.mxu0 0.0
    %354 = vmatpush.msra.mxu0 0.0
    %355 = vmatpush.msra.mxu0 %v285
    %356 = vmatpush.msra.mxu0 %v280
    %357 = vmatpush.msra.mxu0 %v275
    %358 = vmatpush.msra.mxu0 %v270
    %359 = vmatpush.msra.mxu0 %v265
    %360 = vmatpush.msra.mxu0 %v260
    %361 = vmatpush.msra.mxu0 %v255
    %362 = vmatpush.msra.mxu0 %v250
    %363 = vmatmul.f32.gmra.mxu0 %v144
    %v364 = vpop.f32.mrf.mxu0
    %v365 = vadd.f32 0.0, %v364
    %366 = vdwg.mxu0
    %367 = vmatpush.msra.mxu0 0.0
    %368 = vmatpush.msra.mxu0 0.0
    %369 = vmatpush.msra.mxu0 0.0
    %370 = vmatpush.msra.mxu0 0.0
    %371 = vmatpush.msra.mxu0 0.0
    %372 = vmatpush.msra.mxu0 0.0
    %373 = vmatpush.msra.mxu0 0.0
    %374 = vmatpush.msra.mxu0 0.0
    %375 = vmatpush.msra.mxu0 %v286
    %376 = vmatpush.msra.mxu0 %v281
    %377 = vmatpush.msra.mxu0 %v276
    %378 = vmatpush.msra.mxu0 %v271
    %379 = vmatpush.msra.mxu0 %v266
    %380 = vmatpush.msra.mxu0 %v261
    %381 = vmatpush.msra.mxu0 %v256
    %382 = vmatpush.msra.mxu0 %v251
    %383 = vmatmul.f32.gmra.mxu0 %v144
    %v384 = vpop.f32.mrf.mxu0
    %v385 = vadd.f32 0.0, %v384
    %386 = vdwg.mxu0
    %v387 = vmax.f32 %v164, %v305
    %v388 = vmax.f32 %v184, %v325
    %v389 = vmax.f32 %v204, %v345
    %v390 = vmax.f32 %v224, %v365
    %v391 = vmax.f32 %v244, %v385
    %v392 = vld [vmem:[#allocation7] sm:$0x1f]
    %v394 = vperm.slane %v392, 0
    %v395 = vperm.slane %v392, 1
    %v396 = vperm.slane %v392, 2
    %v397 = vperm.slane %v392, 3
    %v398 = vperm.slane %v392, 4
    %v404 = vadd.f32 %v387, %v394
    %v405 = vadd.f32 %v388, %v395
    %v406 = vadd.f32 %v389, %v396
    %v407 = vadd.f32 %v390, %v397
    %v408 = vadd.f32 %v391, %v398
    %v409 = vtanh.pop %v404
    %v410 = vtanh.pop %v405
    %v411 = vtanh.pop %v406
    %v412 = vtanh.pop %v407
    %v413 = vtanh.pop %v408
    %v414 = vld [vmem:[#allocation8] sm:$0xff]
    %v415 = vld [vmem:[#allocation8 + $0x8] sm:$0xff]
    %v416 = vld [vmem:[#allocation8 + $0x10] sm:$0xff]
    %v417 = vld [vmem:[#allocation8 + $0x18] sm:$0xff]
    %v418 = vld [vmem:[#allocation8 + $0x20] sm:$0xff]
    %v419 = vld [vmem:[#allocation8 + $0x28] sm:$0xff]
    %v420 = vld [vmem:[#allocation8 + $0x30] sm:$0xff]
    %v421 = vld [vmem:[#allocation8 + $0x38] sm:$0xff]
    %v422 = vld [vmem:[#allocation8 + $0x40] sm:$0xff]
    %v423 = vld [vmem:[#allocation8 + $0x48] sm:$0xff]
    %v424 = vld [vmem:[#allocation8 + $0x50] sm:$0xff]
    %v425 = vld [vmem:[#allocation8 + $0x58] sm:$0xff]
    %v426 = vld [vmem:[#allocation8 + $0x60] sm:$0xff]
    %v427 = vld [vmem:[#allocation8 + $0x68] sm:$0xff]
    %v428 = vld [vmem:[#allocation8 + $0x70] sm:$0xff]
    %v429 = vld [vmem:[#allocation8 + $0x78] sm:$0xff]
    %v430 = vld [vmem:[#allocation8 + $0x80] sm:$0xff]
    %v431 = vld [vmem:[#allocation8 + $0x88] sm:$0xff]
    %v432 = vld [vmem:[#allocation8 + $0x90] sm:$0xff]
    %v433 = vld [vmem:[#allocation8 + $0x98] sm:$0xff]
    %v434 = vld [vmem:[#allocation8 + $0xa0] sm:$0xff]
    %v435 = vld [vmem:[#allocation8 + $0xa8] sm:$0xff]
    %v436 = vld [vmem:[#allocation8 + $0xb0] sm:$0xff]
    %v437 = vld [vmem:[#allocation8 + $0xb8] sm:$0xff]
    %v438 = vld [vmem:[#allocation8 + $0xc0] sm:$0xff]
    %v439 = vld [vmem:[#allocation8 + $0xc8] sm:$0xff]
    %v440 = vld [vmem:[#allocation8 + $0xd0] sm:$0xff]
    %v441 = vld [vmem:[#allocation8 + $0xd8] sm:$0xff]
    %v442 = vld [vmem:[#allocation8 + $0xe0] sm:$0xff]
    %v443 = vld [vmem:[#allocation8 + $0xe8] sm:$0xff]
    %v444 = vld [vmem:[#allocation8 + $0xf0] sm:$0xff]
    %v445 = vld [vmem:[#allocation8 + $0xf8] sm:$0xff]
    %v446 = vld [vmem:[#allocation8 + $0x100] sm:$0xff]
    %v447 = vld [vmem:[#allocation8 + $0x108] sm:$0xff]
    %v448 = vld [vmem:[#allocation8 + $0x110] sm:$0xff]
    %v449 = vld [vmem:[#allocation8 + $0x118] sm:$0xff]
    %v450 = vld [vmem:[#allocation8 + $0x120] sm:$0xff]
    %v451 = vld [vmem:[#allocation8 + $0x128] sm:$0xff]
    %v452 = vld [vmem:[#allocation8 + $0x130] sm:$0xff]
    %v453 = vld [vmem:[#allocation8 + $0x138] sm:$0xff]
    %v454 = vld [vmem:[#allocation8 + $0x140] sm:$0xff]
    %v455 = vld [vmem:[#allocation8 + $0x148] sm:$0xff]
    %v456 = vld [vmem:[#allocation8 + $0x150] sm:$0xff]
    %v457 = vld [vmem:[#allocation8 + $0x158] sm:$0xff]
    %v458 = vld [vmem:[#allocation8 + $0x160] sm:$0xff]
    %v459 = vld [vmem:[#allocation8 + $0x168] sm:$0xff]
    %v460 = vld [vmem:[#allocation8 + $0x170] sm:$0xff]
    %v461 = vld [vmem:[#allocation8 + $0x178] sm:$0xff]
    %v462 = vld [vmem:[#allocation8 + $0x180] sm:$0xff]
    %v463 = vld [vmem:[#allocation8 + $0x188] sm:$0xff]
    %v464 = vld [vmem:[#allocation8 + $0x190] sm:$0xff]
    %v465 = vld [vmem:[#allocation8 + $0x198] sm:$0xff]
    %v466 = vld [vmem:[#allocation8 + $0x1a0] sm:$0xff]
    %v467 = vld [vmem:[#allocation8 + $0x1a8] sm:$0xff]
    %v468 = vld [vmem:[#allocation8 + $0x1b0] sm:$0xff]
    %v469 = vld [vmem:[#allocation8 + $0x1b8] sm:$0xff]
    %v470 = vld [vmem:[#allocation8 + $0x1c0] sm:$0xff]
    %v471 = vld [vmem:[#allocation8 + $0x1c8] sm:$0xff]
    %v472 = vld [vmem:[#allocation8 + $0x1d0] sm:$0xff]
    %v473 = vld [vmem:[#allocation8 + $0x1d8] sm:$0xff]
    %v474 = vld [vmem:[#allocation8 + $0x1e0] sm:$0xff]
    %v475 = vld [vmem:[#allocation8 + $0x1e8] sm:$0xff]
    %v476 = vld [vmem:[#allocation8 + $0x1f0] sm:$0xff]
    %v477 = vld [vmem:[#allocation8 + $0x1f8] sm:$0xff]
    %v478 = vld [vmem:[#allocation8 + $0x200] sm:$0xff]
    %v479 = vld [vmem:[#allocation8 + $0x208] sm:$0xff]
    %v480 = vld [vmem:[#allocation8 + $0x210] sm:$0xff]
    %v481 = vld [vmem:[#allocation8 + $0x218] sm:$0xff]
    %v482 = vld [vmem:[#allocation8 + $0x220] sm:$0xff]
    %v483 = vld [vmem:[#allocation8 + $0x228] sm:$0xff]
    %v484 = vld [vmem:[#allocation8 + $0x230] sm:$0xff]
    %v485 = vld [vmem:[#allocation8 + $0x238] sm:$0xff]
    %v486 = vld [vmem:[#allocation8 + $0x240] sm:$0xf]
    %v487 = vld [vmem:[%s4] sm:$0x1]
    %v489 = vperm.slane %v487, 0
    %vm491 = vcmask 556032
    %v493 = vsel %vm491, %v413, 0
    %vm495 = vcmask 1043456
    %v497 = vsel %vm495, %v486, 0
    %499 = vmatpush.msra.mxu0 %v429
    %500 = vmatpush.msra.mxu0 %v428
    %501 = vmatpush.msra.mxu0 %v427
    %502 = vmatpush.msra.mxu0 %v426
    %503 = vmatpush.msra.mxu0 %v425
    %504 = vmatpush.msra.mxu0 %v424
    %505 = vmatpush.msra.mxu0 %v423
    %506 = vmatpush.msra.mxu0 %v422
    %507 = vmatpush.msra.mxu0 %v421
    %508 = vmatpush.msra.mxu0 %v420
    %509 = vmatpush.msra.mxu0 %v419
    %510 = vmatpush.msra.mxu0 %v418
    %511 = vmatpush.msra.mxu0 %v417
    %512 = vmatpush.msra.mxu0 %v416
    %513 = vmatpush.msra.mxu0 %v415
    %514 = vmatpush.msra.mxu0 %v414
    %515 = vmatmul.f32.gmra.mxu0 %v409
    %v516 = vpop.f32.mrf.mxu0
    %v517 = vadd.f32 %v489, %v516
    %518 = vdwg.mxu0
    %519 = vmatpush.msra.mxu0 %v445
    %520 = vmatpush.msra.mxu0 %v444
    %521 = vmatpush.msra.mxu0 %v443
    %522 = vmatpush.msra.mxu0 %v442
    %523 = vmatpush.msra.mxu0 %v441
    %524 = vmatpush.msra.mxu0 %v440
    %525 = vmatpush.msra.mxu0 %v439
    %526 = vmatpush.msra.mxu0 %v438
    %527 = vmatpush.msra.mxu0 %v437
    %528 = vmatpush.msra.mxu0 %v436
    %529 = vmatpush.msra.mxu0 %v435
    %530 = vmatpush.msra.mxu0 %v434
    %531 = vmatpush.msra.mxu0 %v433
    %532 = vmatpush.msra.mxu0 %v432
    %533 = vmatpush.msra.mxu0 %v431
    %534 = vmatpush.msra.mxu0 %v430
    %535 = vmatmul.f32.gmra.mxu0 %v410
    %v536 = vpop.f32.mrf.mxu0
    %v537 = vadd.f32 %v517, %v536
    %538 = vdwg.mxu0
    %539 = vmatpush.msra.mxu0 %v461
    %540 = vmatpush.msra.mxu0 %v460
    %541 = vmatpush.msra.mxu0 %v459
    %542 = vmatpush.msra.mxu0 %v458
    %543 = vmatpush.msra.mxu0 %v457
    %544 = vmatpush.msra.mxu0 %v456
    %545 = vmatpush.msra.mxu0 %v455
    %546 = vmatpush.msra.mxu0 %v454
    %547 = vmatpush.msra.mxu0 %v453
    %548 = vmatpush.msra.mxu0 %v452
    %549 = vmatpush.msra.mxu0 %v451
    %550 = vmatpush.msra.mxu0 %v450
    %551 = vmatpush.msra.mxu0 %v449
    %552 = vmatpush.msra.mxu0 %v448
    %553 = vmatpush.msra.mxu0 %v447
    %554 = vmatpush.msra.mxu0 %v446
    %555 = vmatmul.f32.gmra.mxu0 %v411
    %v556 = vpop.f32.mrf.mxu0
    %v557 = vadd.f32 %v537, %v556
    %558 = vdwg.mxu0
    %559 = vmatpush.msra.mxu0 %v477
    %560 = vmatpush.msra.mxu0 %v476
    %561 = vmatpush.msra.mxu0 %v475
    %562 = vmatpush.msra.mxu0 %v474
    %563 = vmatpush.msra.mxu0 %v473
    %564 = vmatpush.msra.mxu0 %v472
    %565 = vmatpush.msra.mxu0 %v471
    %566 = vmatpush.msra.mxu0 %v470
    %567 = vmatpush.msra.mxu0 %v469
    %568 = vmatpush.msra.mxu0 %v468
    %569 = vmatpush.msra.mxu0 %v467
    %570 = vmatpush.msra.mxu0 %v466
    %571 = vmatpush.msra.mxu0 %v465
    %572 = vmatpush.msra.mxu0 %v464
    %573 = vmatpush.msra.mxu0 %v463
    %574 = vmatpush.msra.mxu0 %v462
    %575 = vmatmul.f32.gmra.mxu0 %v412
    %v576 = vpop.f32.mrf.mxu0
    %v577 = vadd.f32 %v557, %v576
    %578 = vdwg.mxu0
    %579 = vmatpush.msra.mxu0 0.0
    %580 = vmatpush.msra.mxu0 0.0
    %581 = vmatpush.msra.mxu0 0.0
    %582 = vmatpush.msra.mxu0 0.0
    %583 = vmatpush.msra.mxu0 0.0
    %584 = vmatpush.msra.mxu0 0.0
    %585 = vmatpush.msra.mxu0 0.0
    %586 = vmatpush.msra.mxu0 %v497
    %587 = vmatpush.msra.mxu0 %v485
    %588 = vmatpush.msra.mxu0 %v484
    %589 = vmatpush.msra.mxu0 %v483
    %590 = vmatpush.msra.mxu0 %v482
    %591 = vmatpush.msra.mxu0 %v481
    %592 = vmatpush.msra.mxu0 %v480
    %593 = vmatpush.msra.mxu0 %v479
    %594 = vmatpush.msra.mxu0 %v478
    %595 = vmatmul.f32.gmra.mxu0 %v493
    %v596 = vpop.f32.mrf.mxu0
    %v597 = vadd.f32 %v577, %v596
    %598 = vdwg.mxu0
    %v599 = vtanh.pop %v597
    %v600 = vld [vmem:[#allocation10] sm:$0xff]
    %v601 = vld [vmem:[#allocation10 + $0x8] sm:$0xff]
    %v602 = vld [vmem:[#allocation10 + $0x10] sm:$0xff]
    %v603 = vld [vmem:[#allocation10 + $0x18] sm:$0xff]
    %v604 = vld [vmem:[#allocation10 + $0x20] sm:$0xff]
    %v605 = vld [vmem:[#allocation10 + $0x28] sm:$0xff]
    %v606 = vld [vmem:[#allocation10 + $0x30] sm:$0xff]
    %v607 = vld [vmem:[#allocation10 + $0x38] sm:$0xff]
    %v608 = vld [vmem:[#allocation10 + $0x40] sm:$0xff]
    %v609 = vld [vmem:[#allocation10 + $0x48] sm:$0xff]
    %v610 = vld [vmem:[#allocation10 + $0x50] sm:$0xff]
    %v611 = vld [vmem:[#allocation10 + $0x58] sm:$0xff]
    %v612 = vld [vmem:[#allocation10 + $0x60] sm:$0xff]
    %v613 = vld [vmem:[#allocation10 + $0x68] sm:$0xff]
    %v614 = vld [vmem:[#allocation10 + $0x70] sm:$0xff]
    %v615 = vld [vmem:[#allocation10 + $0x78] sm:$0xff]
    %v616 = vld [vmem:[%s6] sm:$0x1]
    %v618 = vperm.slane %v616, 0
    %620 = vmatpush.msra.mxu0 %v615
    %621 = vmatpush.msra.mxu0 %v614
    %622 = vmatpush.msra.mxu0 %v613
    %623 = vmatpush.msra.mxu0 %v612
    %624 = vmatpush.msra.mxu0 %v611
    %625 = vmatpush.msra.mxu0 %v610
    %626 = vmatpush.msra.mxu0 %v609
    %627 = vmatpush.msra.mxu0 %v608
    %628 = vmatpush.msra.mxu0 %v607
    %629 = vmatpush.msra.mxu0 %v606
    %630 = vmatpush.msra.mxu0 %v605
    %631 = vmatpush.msra.mxu0 %v604
    %632 = vmatpush.msra.mxu0 %v603
    %633 = vmatpush.msra.mxu0 %v602
    %634 = vmatpush.msra.mxu0 %v601
    %635 = vmatpush.msra.mxu0 %v600
    %636 = vmatmul.f32.gmra.mxu0 %v599
    %v637 = vpop.f32.mrf.mxu0
    %v638 = vadd.f32 %v618, %v637
    %639 = vdwg.mxu0
    %640 = vst [vmem:[#allocation11] sm:$0xf] %v638
    // Predicated region
    $region50: #{tpu_custom_call.1} parent=1 // pred_check
      _
    $region51: #{tpu_custom_call.1} parent=1 // pred_check_branch
      %642 = sbr.rel (0) target = $region53
    $region52: #{tpu_custom_call.1} parent=1 // pred_region
      %644 = vsyncadd [#allocation4], 0
      %s646 = sshll.u32 [#allocation11], 4
      %s647 = int_to_ptr.vmem [resolvable:$true] %s646
      %s648 = sshll.u32 %s7, 4
      %s649 = int_to_ptr.hbm [resolvable:$true] %s648
      %651 = dma.vmem_to_hbm [thread:$0]  %s647, 64, %s649, [#allocation4]
    $region53: #{tpu_custom_call.1} parent=1 // pred_fallthru
      _
    // Predicated region
    $region54: #{tpu_custom_call.1} parent=1 // pred_check
      _
    $region55: #{tpu_custom_call.1} parent=1 // pred_check_branch
      %653 = sbr.rel (0) target = $region57
    $region56: #{tpu_custom_call.1} parent=1 // pred_region
      %655 = dma.done [#allocation4], 64
    $region57: #{tpu_custom_call.1} parent=1 // pred_fallthru
      _
    %656 = vsyncpa [#allocation3], 1
    %657 = vsyncpa [#allocation6], 1
    %658 = vsyncpa [#allocation9], 1
    %659 = vsyncpa [#allocation4], 1

</llo_original>
